<compile_context>
chip_gen: v5e
topology: v5e:2x2
jax: 0.10.0
libtpu: 0.0.40
codegen_flags: <defaults>
</compile_context>

<pallas_src>
import math
import functools

import jax
import jax.numpy as jnp
from jax.experimental import pallas as pl
from jax.experimental.pallas import tpu as pltpu


_INV_SQRT2 = 1.0 / math.sqrt(2.0)
_SQRT_2_OVER_PI = math.sqrt(2.0 / math.pi)


def _gelu_f32(h, approximate):
    if approximate:
        # tanh-approximate GELU: the transcendental rides the EUP slot instead
        # of a long VALU erf polynomial (use only if ~1e-3 deviation from the
        # exact erf GELU is acceptable).
        inner = _SQRT_2_OVER_PI * (h + 0.044715 * (h * h * h))
        return 0.5 * h * (1.0 + jnp.tanh(inner))
    # Exact erf-based gelu: matches the PyTorch module.
    return h * 0.5 * (1.0 + jax.lax.erf(h * _INV_SQRT2))


def _layer_norm_f32(h, gamma, beta, eps):
    # Two-pass (centered) variance: numerically safer than E[x^2]-E[x]^2, and
    # the XLU reductions are not the binding slot while the gelu VALU work
    # dominates.  TODO(synk): switch to a fused sum/sum-of-squares pass if a
    # bundle dump shows the XLU slot contended after moving gelu to the EUP.
    mean = jnp.mean(h, axis=-1, keepdims=True)
    centered = h - mean
    var = jnp.mean(centered * centered, axis=-1, keepdims=True)
    return centered * jax.lax.rsqrt(var + eps) * gamma + beta


def _resident_kernel(x_ref, w_ref, b_ref, g_ref, beta_ref, o_ref,
                     *, eps, approximate_gelu):
    # x_ref: (tm, H) row tile.  w_ref: (H, H) resident weight in PyTorch
    # (out, in) layout.  NT matmul: contract x dim 1 with w dim 1 == x @ W.T,
    # consumed directly by the MXU (no per-step transpose of the weight).
    h = jax.lax.dot_general(
        x_ref[...], w_ref[...],
        dimension_numbers=(((1,), (1,)), ((), ())),
        preferred_element_type=jnp.float32,
    )
    h = h + b_ref[...].astype(jnp.float32)
    h = _gelu_f32(h, approximate_gelu)
    out = _layer_norm_f32(h, g_ref[...].astype(jnp.float32),
                          beta_ref[...].astype(jnp.float32), eps)
    o_ref[...] = out.astype(o_ref.dtype)


def _ktiled_kernel(x_ref, w_ref, b_ref, g_ref, beta_ref, o_ref, acc_ref,
                   *, eps, approximate_gelu):
    # Contraction-tiled variant for weights too large to keep resident.
    k = pl.program_id(1)

    @pl.when(k == 0)
    def _():
        acc_ref[...] = jnp.zeros_like(acc_ref)

    acc_ref[...] += jax.lax.dot_general(
        x_ref[...], w_ref[...],
        dimension_numbers=(((1,), (1,)), ((), ())),
        preferred_element_type=jnp.float32,
    )

    @pl.when(k == pl.num_programs(1) - 1)
    def _():
        h = acc_ref[...] + b_ref[...].astype(jnp.float32)
        h = _gelu_f32(h, approximate_gelu)
        out = _layer_norm_f32(h, g_ref[...].astype(jnp.float32),
                              beta_ref[...].astype(jnp.float32), eps)
        o_ref[...] = out.astype(o_ref.dtype)


def _round_up(n, m):
    return (n + m - 1) // m * m


def _choose_row_tile(M, row_tile):
    tm = max(8, min(_round_up(row_tile, 8), _round_up(M, 8)))
    # Guarantee >= 2 grid steps when possible so the "parallel" row axis can
    # shard across v7x's two TensorCores (no-op on 1-TC v5e/v6e).
    if M > 8 and pl.cdiv(M, tm) < 2:
        tm = max(8, _round_up(pl.cdiv(M, 2), 8))
    return tm


def _vmem_budget_bytes():
    try:
        phys = pltpu.get_tpu_info().vmem_capacity_bytes
    except Exception:
        phys = 64 * 1024 * 1024  # assume the tightest chip (v7x, 64 MiB / TC)
    return int(0.85 * phys)


def visual_prediction_head_transform(x, w, b, gamma, beta, *, eps=1e-12,
                                     row_tile=512, approximate_gelu=False):
    """x: (..., H).  w: (H, H) PyTorch (out, in) layout.  Returns x's shape/dtype."""
    orig_shape = x.shape
    H = orig_shape[-1]
    x2d = x.reshape(-1, H)
    M = x2d.shape[0]

    b2d = b.reshape(1, H)
    g2d = gamma.reshape(1, H)
    beta2d = beta.reshape(1, H)

    x_itemsize = jnp.dtype(x.dtype).itemsize
    w_itemsize = jnp.dtype(w.dtype).itemsize
    out_itemsize = x_itemsize

    tm = _choose_row_tile(M, row_tile)
    num_row_tiles = pl.cdiv(M, tm)
    Mp = num_row_tiles * tm

    cost = pl.CostEstimate(
        flops=2 * Mp * H * H,
        transcendentals=Mp * H,
        bytes_accessed=(M * H * x_itemsize          # x
                        + H * H * w_itemsize        # weight
                        + 3 * H * 4                 # bias / gamma / beta
                        + M * H * out_itemsize),    # output
    )

    vmem_budget = _vmem_budget_bytes()

    # VMEM needed with the weight fully resident: single-buffered weight and
    # params, double-buffered x/out tiles, plus the f32 epilogue intermediates
    # ((tm,H) matmul result + LayerNorm temporaries) and compiler headroom.
    resident_vmem = (H * H * w_itemsize
                     + 2 * tm * H * x_itemsize
                     + 2 * tm * H * out_itemsize
                     + 3 * tm * H * 4
                     + 3 * H * 4
                     + (1 << 20))

    if resident_vmem <= vmem_budget:
        vmem_limit = int(min(max(resident_vmem, 32 * 1024 * 1024), vmem_budget))
        kernel = functools.partial(_resident_kernel, eps=eps,
                                   approximate_gelu=approximate_gelu)
        out = pl.pallas_call(
            kernel,
            out_shape=jax.ShapeDtypeStruct((M, H), x.dtype),
            grid_spec=pltpu.PrefetchScalarGridSpec(
                num_scalar_prefetch=0,
                grid=(num_row_tiles,),
                in_specs=[
                    pl.BlockSpec((tm, H), lambda i: (i, 0)),       # x row tile
                    # Grid-invariant operands: single pipeline buffer.
                    pl.BlockSpec((H, H), lambda i: (0, 0),
                                 pipeline_mode=pl.Buffered(1)),    # weight
                    pl.BlockSpec((1, H), lambda i: (0, 0),
                                 pipeline_mode=pl.Buffered(1)),    # bias
                    pl.BlockSpec((1, H), lambda i: (0, 0),
                                 pipeline_mode=pl.Buffered(1)),    # gamma
                    pl.BlockSpec((1, H), lambda i: (0, 0),
                                 pipeline_mode=pl.Buffered(1)),    # beta
                ],
                out_specs=pl.BlockSpec((tm, H), lambda i: (i, 0)),
            ),
            compiler_params=pltpu.CompilerParams(
                dimension_semantics=("parallel",),
                vmem_limit_bytes=vmem_limit,
            ),
            cost_estimate=cost,
        )(x2d, w, b2d, g2d, beta2d)
        return out.reshape(orig_shape)

    # --- Large-H fallback (e.g. H >= ~4k bf16 on v7x): K-tiled contraction ---
    tm_k = min(tm, 256)
    if H % 512 == 0:
        tk = 512
    elif H % 256 == 0:
        tk = 256
    elif H % 128 == 0:
        tk = 128
    else:
        tk = H  # TODO(synk): ragged contraction tiles would need K-masking.
    num_row_tiles_k = pl.cdiv(M, tm_k)
    num_k_tiles = H // tk

    ktiled_vmem = (2 * H * tk * w_itemsize        # double-buffered weight K-slabs
                   + 2 * tm_k * tk * x_itemsize   # double-buffered x tiles
                   + 2 * tm_k * H * out_itemsize  # double-buffered out tiles
                   + tm_k * H * 4                 # f32 accumulator scratch
                   + 2 * tm_k * H * 4             # epilogue temporaries
                   + 3 * H * 4
                   + (1 << 20))
    vmem_limit = int(min(max(ktiled_vmem, 32 * 1024 * 1024), vmem_budget))
    kernel = functools.partial(_ktiled_kernel, eps=eps,
                               approximate_gelu=approximate_gelu)
    out = pl.pallas_call(
        kernel,
        out_shape=jax.ShapeDtypeStruct((M, H), x.dtype),
        grid_spec=pltpu.PrefetchScalarGridSpec(
            num_scalar_prefetch=0,
            grid=(num_row_tiles_k, num_k_tiles),
            in_specs=[
                pl.BlockSpec((tm_k, tk), lambda i, k: (i, k)),   # x tile
                pl.BlockSpec((H, tk), lambda i, k: (0, k)),      # weight K-slab
                pl.BlockSpec((1, H), lambda i, k: (0, 0),
                             pipeline_mode=pl.Buffered(1)),      # bias
                pl.BlockSpec((1, H), lambda i, k: (0, 0),
                             pipeline_mode=pl.Buffered(1)),      # gamma
                pl.BlockSpec((1, H), lambda i, k: (0, 0),
                             pipeline_mode=pl.Buffered(1)),      # beta
            ],
            out_specs=pl.BlockSpec((tm_k, H), lambda i, k: (i, 0)),
            scratch_shapes=[pltpu.VMEM((tm_k, H), jnp.float32)],
        ),
        compiler_params=pltpu.CompilerParams(
            dimension_semantics=("parallel", "arbitrary"),
            vmem_limit_bytes=vmem_limit,
        ),
        cost_estimate=cost,
    )(x2d, w, b2d, g2d, beta2d)
    return out.reshape(orig_shape)


def _reference(x, w, b, gamma, beta, eps=1e-12):
    h = jnp.einsum("...i,oi->...o", x, w) + b
    h = h * 0.5 * (1.0 + jax.lax.erf(h / jnp.sqrt(2.0)))
    mean = jnp.mean(h, axis=-1, keepdims=True)
    var = jnp.mean((h - mean) ** 2, axis=-1, keepdims=True)
    return (h - mean) / jnp.sqrt(var + eps) * gamma + beta


if __name__ == "__main__":
    key = jax.random.PRNGKey(0)
    batch, seq, hidden = 2, 8, 32  # small shapes consistent with the module

    k_x, k_w, k_b, k_g, k_beta = jax.random.split(key, 5)
    x = jax.random.normal(k_x, (batch, seq, hidden), dtype=jnp.float32)

    # Deterministic synthetic parameters (PyTorch (out, in) weight layout).
    w = jax.random.normal(k_w, (hidden, hidden), dtype=jnp.float32) * 0.02
    b = jax.random.normal(k_b, (hidden,), dtype=jnp.float32) * 0.02
    gamma = 1.0 + 0.1 * jax.random.normal(k_g, (hidden,), dtype=jnp.float32)
    beta = 0.1 * jax.random.normal(k_beta, (hidden,), dtype=jnp.float32)

    out = visual_prediction_head_transform(x, w, b, gamma, beta, eps=1e-12)
    out = jax.block_until_ready(out)

    ref = _reference(x, w, b, gamma, beta, eps=1e-12)
    assert out.shape == x.shape
    assert jnp.allclose(out, ref, atol=1e-5, rtol=1e-5), "mismatch vs reference"

    print("KERNEL_OK")
</pallas_src>

<mosaic_0001>
module attributes {stable_mosaic.version = 11 : i64} {
  func.func @_resident_kernel(%arg0: i32, %arg1: memref<8x32xf32, #tpu.memory_space<vmem>>, %arg2: memref<32x32xf32, #tpu.memory_space<vmem>>, %arg3: memref<1x32xf32, #tpu.memory_space<vmem>>, %arg4: memref<1x32xf32, #tpu.memory_space<vmem>>, %arg5: memref<1x32xf32, #tpu.memory_space<vmem>>, %arg6: memref<8x32xf32, #tpu.memory_space<vmem>>) attributes {dimension_semantics = [#tpu.dimension_semantics<parallel>], iteration_bounds = array<i64: 2>, scalar_prefetch = 0 : i64, scratch_operands = 0 : i64, tpu.core_type = #tpu.core_type<tc>, window_params = [{transform_indices = @transform_0, window_bounds = array<i64: 8, 32>}, {pipeline_mode = #tpu.pipeline_mode<synchronous>, transform_indices = @transform_1, window_bounds = array<i64: 32, 32>}, {pipeline_mode = #tpu.pipeline_mode<synchronous>, transform_indices = @transform_2, window_bounds = array<i64: 1, 32>}, {pipeline_mode = #tpu.pipeline_mode<synchronous>, transform_indices = @transform_3, window_bounds = array<i64: 1, 32>}, {pipeline_mode = #tpu.pipeline_mode<synchronous>, transform_indices = @transform_4, window_bounds = array<i64: 1, 32>}, {transform_indices = @transform_5, window_bounds = array<i64: 8, 32>}]} {
    %c0 = arith.constant 0 : index
    %c0_0 = arith.constant 0 : index
    %0 = vector.load %arg1[%c0, %c0_0] : memref<8x32xf32, #tpu.memory_space<vmem>>, vector<8x32xf32>
    %c0_1 = arith.constant 0 : index
    %c0_2 = arith.constant 0 : index
    %1 = vector.load %arg2[%c0_1, %c0_2] : memref<32x32xf32, #tpu.memory_space<vmem>>, vector<32x32xf32>
    %cst = arith.constant dense<0.000000e+00> : vector<8x32xf32>
    %2 = tpu.matmul %0, %1, %cst {dimension_numbers = #tpu.dot_dimension_numbers<[1], [1], [0], [0], [0, 0, 1, 0], [], []>} : vector<8x32xf32>, vector<32x32xf32>, vector<8x32xf32> -> vector<8x32xf32>
    %c0_3 = arith.constant 0 : index
    %c0_4 = arith.constant 0 : index
    %3 = vector.load %arg3[%c0_3, %c0_4] : memref<1x32xf32, #tpu.memory_space<vmem>>, vector<1x32xf32>
    %4 = vector.broadcast %3 : vector<1x32xf32> to vector<8x32xf32>
    %5 = arith.addf %2, %4 : vector<8x32xf32>
    %cst_5 = arith.constant 5.000000e-01 : f32
    %6 = vector.broadcast %cst_5 : f32 to vector<8x32xf32>
    %7 = arith.mulf %5, %6 : vector<8x32xf32>
    %cst_6 = arith.constant 0.707106769 : f32
    %8 = vector.broadcast %cst_6 : f32 to vector<8x32xf32>
    %9 = arith.mulf %5, %8 : vector<8x32xf32>
    %10 = math.erf %9 : vector<8x32xf32>
    %cst_7 = arith.constant 1.000000e+00 : f32
    %11 = vector.broadcast %cst_7 : f32 to vector<8x32xf32>
    %12 = arith.addf %11, %10 : vector<8x32xf32>
    %13 = arith.mulf %7, %12 : vector<8x32xf32>
    %c0_8 = arith.constant 0 : index
    %c0_9 = arith.constant 0 : index
    %14 = vector.load %arg4[%c0_8, %c0_9] : memref<1x32xf32, #tpu.memory_space<vmem>>, vector<1x32xf32>
    %c0_10 = arith.constant 0 : index
    %c0_11 = arith.constant 0 : index
    %15 = vector.load %arg5[%c0_10, %c0_11] : memref<1x32xf32, #tpu.memory_space<vmem>>, vector<1x32xf32>
    %cst_12 = arith.constant dense<0.000000e+00> : vector<8xf32>
    %16 = vector.multi_reduction <add>, %13, %cst_12 [1] : vector<8x32xf32> to vector<8xf32>
    %17 = vector.shape_cast %16 : vector<8xf32> to vector<8x1xf32>
    %cst_13 = arith.constant 3.200000e+01 : f32
    %18 = vector.broadcast %cst_13 : f32 to vector<8x1xf32>
    %19 = arith.divf %17, %18 : vector<8x1xf32>
    %20 = vector.broadcast %19 : vector<8x1xf32> to vector<8x32xf32>
    %21 = arith.subf %13, %20 : vector<8x32xf32>
    %22 = arith.mulf %21, %21 : vector<8x32xf32>
    %cst_14 = arith.constant dense<0.000000e+00> : vector<8xf32>
    %23 = vector.multi_reduction <add>, %22, %cst_14 [1] : vector<8x32xf32> to vector<8xf32>
    %24 = vector.shape_cast %23 : vector<8xf32> to vector<8x1xf32>
    %cst_15 = arith.constant 3.200000e+01 : f32
    %25 = vector.broadcast %cst_15 : f32 to vector<8x1xf32>
    %26 = arith.divf %24, %25 : vector<8x1xf32>
    %cst_16 = arith.constant 9.99999996E-13 : f32
    %27 = vector.broadcast %cst_16 : f32 to vector<8x1xf32>
    %28 = arith.addf %26, %27 : vector<8x1xf32>
    %29 = math.rsqrt %28 : vector<8x1xf32>
    %30 = vector.broadcast %29 : vector<8x1xf32> to vector<8x32xf32>
    %31 = arith.mulf %21, %30 : vector<8x32xf32>
    %32 = vector.broadcast %14 : vector<1x32xf32> to vector<8x32xf32>
    %33 = arith.mulf %31, %32 : vector<8x32xf32>
    %34 = vector.broadcast %15 : vector<1x32xf32> to vector<8x32xf32>
    %35 = arith.addf %33, %34 : vector<8x32xf32>
    %c0_17 = arith.constant 0 : index
    %c0_18 = arith.constant 0 : index
    %36 = vector.load %arg6[%c0_17, %c0_18] : memref<8x32xf32, #tpu.memory_space<vmem>>, vector<8x32xf32>
    tpu.vector_store %arg6[%c0_17, %c0_18], %35 {strides = array<i32>} : memref<8x32xf32, #tpu.memory_space<vmem>>, vector<8x32xf32>,
    return
  }
  func.func @transform_0(%arg0: i32) -> (i32, i32) {
    %c0_i32 = arith.constant 0 : i32
    %c0_i32_0 = arith.constant 0 : i32
    return %arg0, %c0_i32 : i32, i32
  }
  func.func @transform_1(%arg0: i32) -> (i32, i32) {
    %c0_i32 = arith.constant 0 : i32
    %c0_i32_0 = arith.constant 0 : i32
    %c0_i32_1 = arith.constant 0 : i32
    return %c0_i32, %c0_i32_0 : i32, i32
  }
  func.func @transform_2(%arg0: i32) -> (i32, i32) {
    %c0_i32 = arith.constant 0 : i32
    %c0_i32_0 = arith.constant 0 : i32
    %c0_i32_1 = arith.constant 0 : i32
    return %c0_i32, %c0_i32_0 : i32, i32
  }
  func.func @transform_3(%arg0: i32) -> (i32, i32) {
    %c0_i32 = arith.constant 0 : i32
    %c0_i32_0 = arith.constant 0 : i32
    %c0_i32_1 = arith.constant 0 : i32
    return %c0_i32, %c0_i32_0 : i32, i32
  }
  func.func @transform_4(%arg0: i32) -> (i32, i32) {
    %c0_i32 = arith.constant 0 : i32
    %c0_i32_0 = arith.constant 0 : i32
    %c0_i32_1 = arith.constant 0 : i32
    return %c0_i32, %c0_i32_0 : i32, i32
  }
  func.func @transform_5(%arg0: i32) -> (i32, i32) {
    %c0_i32 = arith.constant 0 : i32
    %c0_i32_0 = arith.constant 0 : i32
    return %arg0, %c0_i32 : i32, i32
  }
}

</mosaic_0001>

<llo_original>
// kernel: tpu_custom_call.1
$region0: #{tpu_custom_call.1}
  #allocation0 [shape = 'u32[]', space=smem, size = 0x4, offset = 0x4, fixed_abs, tag = 'smem constant byte address 0x4 - core index']
  #allocation1 [shape = 'u32[72,128]{1,0:T(1,128)}', space=vmem, size = 0x9000, scoped, tag = 'internal scratch']
  %s0 = inlined_call_operand.hbm [shape: f32[16,32], index: 0, kind: input, shape index: {}]
  %s1 = inlined_call_operand.hbm [shape: f32[32,32], index: 1, kind: input, shape index: {}]
  %s2 = inlined_call_operand.vmem [shape: f32[1,32], index: 2, kind: input, shape index: {}]
  %s3 = inlined_call_operand.vmem [shape: f32[1,32], index: 3, kind: input, shape index: {}]
  %s4 = inlined_call_operand.vmem [shape: f32[1,32], index: 4, kind: input, shape index: {}]
  %s5 = inlined_call_operand.hbm [shape: f32[16,32], index: 5, kind: output, shape index: {}]
  %s6 = sld [smem:[#allocation0]]
  $region61: #{tpu_custom_call.1} parent=0
    _
  %s8 = ssub.s32 1, %s6
  %s9 = scalar_select 0, %s8, %s6
  $region1: #{tpu_custom_call.1} parent=0
    #allocation2 [shape = 'u8[8192]{0}', space=vmem, size = 0x2000, scoped, tag = 'input window, operand 0']
    #allocation3 [shape = 's32[2]{0}', space=sflag, size = 0x8, scoped, tag = 'scoped memory for tpu_custom_call.1']
    #allocation4 [shape = 's32[2]{0}', space=sflag, size = 0x8, scoped, tag = 'scoped memory for tpu_custom_call.1']
    #allocation5 [shape = 'u8[16384]{0}', space=vmem, size = 0x4000, scoped, tag = 'input window, operand 1, single buffered']
    #allocation6 [shape = 's32[1]{0}', space=sflag, size = 0x4, scoped, tag = 'scoped memory for tpu_custom_call.1']
    #allocation7 [shape = 'u8[8192]{0}', space=vmem, size = 0x2000, scoped, tag = 'output window, operand 0']
    %10 = vsyncpa [#allocation3], 0
    %s11 = scalar_lea.sflag [#allocation3], 1
    %12 = vsyncpa %s11, 0
    %13 = vsyncpa [#allocation6], 0
    %14 = vsyncpa [#allocation4], 0
    %s15 = scalar_lea.sflag [#allocation4], 1
    %16 = vsyncpa %s15, 0
    loop: start=0, step=1, limit=4
    $region2: #{tpu_custom_call.1} parent=1 // loop_pre_header
      _
    $region3: #{tpu_custom_call.1} parent=1 // loop_header
      %s18 = sphi 0, %s22
      %p19 = scmp.ge.s32.totalorder %s18, 4
      %s28 = sphi 0, %s30
      %s31 = sphi 0, %s28
      %s32 = sphi 0, %s31
      %s48 = sphi 0, %s32
      %s52 = sphi 0, %s52
      %s54 = sphi 0, %s52
      %s55 = sphi 0, %s54
      %s69 = sphi 0, %s55
      %s73 = sphi 0, %s73
      %s75 = sphi 0, %s73
      %s76 = sphi 0, %s75
      %s90 = sphi 0, %s76
      %s94 = sphi 0, %s94
      %s96 = sphi 0, %s94
      %s97 = sphi 0, %s96
      %s111 = sphi 0, %s97
      %s115 = sphi 0, %s115
      %s117 = sphi 0, %s115
      %s118 = sphi 0, %s117
      %s132 = sphi 0, %s118
      %s138 = sphi 0, %s140
      %s141 = sphi 0, %s138
      %s142 = sphi 0, %s141
      %s158 = sphi 0, %s142
    $region4: #{tpu_custom_call.1} parent=1 // loop_header_branch
      %21 = sbr.rel (%p19) target = $region8
    $region5: #{tpu_custom_call.1} parent=1 // loop_body
      %s23 = ssub.s32 %s18, 1
      %s24 = ssub.s32 %s18, 2
      %s25 = sadd.s32 %s18, 1
      %s26 = ssub.s32 %s18, %s25
      %p27 = scmp.eq.s32.totalorder %s26, 0
      %s29 = sadd.s32 %s28, 1
      %s30 = scalar_select %p27, %s28, %s29
      %p33 = pneg %p27
      %p34 = scmp.eq.s32.totalorder %s18, 1
      %p35 = por %p33, %p34
      %p36 = scmp.ne.s32.totalorder %s28, %s31
      %p37 = scmp.eq.s32.totalorder %s18, 0
      %p38 = por %p36, %p37
      %p39 = scmp.ne.s32.totalorder %s28, %s31
      %p40 = scmp.eq.s32.totalorder %s23, 1
      %p41 = por %p39, %p40
      %p42 = scmp.ne.s32.totalorder %s31, %s32
      %p43 = scmp.eq.s32.totalorder %s23, 0
      %p44 = por %p42, %p43
      %p45 = scmp.ne.s32.totalorder %s31, %s32
      %p46 = scmp.eq.s32.totalorder %s24, 1
      %p47 = por %p45, %p46
      %p49 = scmp.ne.s32.totalorder %s32, %s48
      %p50 = scmp.eq.s32.totalorder %s24, 0
      %p51 = por %p49, %p50
      %s53 = sadd.s32 %s52, 1
      %p56 = scmp.eq.s32.totalorder %s18, 1
      %p57 = scmp.ne.s32.totalorder %s52, %s54
      %p58 = scmp.eq.s32.totalorder %s18, 0
      %p59 = por %p57, %p58
      %p60 = scmp.ne.s32.totalorder %s52, %s54
      %p61 = scmp.eq.s32.totalorder %s23, 1
      %p62 = por %p60, %p61
      %p63 = scmp.ne.s32.totalorder %s54, %s55
      %p64 = scmp.eq.s32.totalorder %s23, 0
      %p65 = por %p63, %p64
      %p66 = scmp.ne.s32.totalorder %s54, %s55
      %p67 = scmp.eq.s32.totalorder %s24, 1
      %p68 = por %p66, %p67
      %p70 = scmp.ne.s32.totalorder %s55, %s69
      %p71 = scmp.eq.s32.totalorder %s24, 0
      %p72 = por %p70, %p71
      %s74 = sadd.s32 %s73, 1
      %p77 = scmp.eq.s32.totalorder %s18, 1
      %p78 = scmp.ne.s32.totalorder %s73, %s75
      %p79 = scmp.eq.s32.totalorder %s18, 0
      %p80 = por %p78, %p79
      %p81 = scmp.ne.s32.totalorder %s73, %s75
      %p82 = scmp.eq.s32.totalorder %s23, 1
      %p83 = por %p81, %p82
      %p84 = scmp.ne.s32.totalorder %s75, %s76
      %p85 = scmp.eq.s32.totalorder %s23, 0
      %p86 = por %p84, %p85
      %p87 = scmp.ne.s32.totalorder %s75, %s76
      %p88 = scmp.eq.s32.totalorder %s24, 1
      %p89 = por %p87, %p88
      %p91 = scmp.ne.s32.totalorder %s76, %s90
      %p92 = scmp.eq.s32.totalorder %s24, 0
      %p93 = por %p91, %p92
      %s95 = sadd.s32 %s94, 1
      %p98 = scmp.eq.s32.totalorder %s18, 1
      %p99 = scmp.ne.s32.totalorder %s94, %s96
      %p100 = scmp.eq.s32.totalorder %s18, 0
      %p101 = por %p99, %p100
      %p102 = scmp.ne.s32.totalorder %s94, %s96
      %p103 = scmp.eq.s32.totalorder %s23, 1
      %p104 = por %p102, %p103
      %p105 = scmp.ne.s32.totalorder %s96, %s97
      %p106 = scmp.eq.s32.totalorder %s23, 0
      %p107 = por %p105, %p106
      %p108 = scmp.ne.s32.totalorder %s96, %s97
      %p109 = scmp.eq.s32.totalorder %s24, 1
      %p110 = por %p108, %p109
      %p112 = scmp.ne.s32.totalorder %s97, %s111
      %p113 = scmp.eq.s32.totalorder %s24, 0
      %p114 = por %p112, %p113
      %s116 = sadd.s32 %s115, 1
      %p119 = scmp.eq.s32.totalorder %s18, 1
      %p120 = scmp.ne.s32.totalorder %s115, %s117
      %p121 = scmp.eq.s32.totalorder %s18, 0
      %p122 = por %p120, %p121
      %p123 = scmp.ne.s32.totalorder %s115, %s117
      %p124 = scmp.eq.s32.totalorder %s23, 1
      %p125 = por %p123, %p124
      %p126 = scmp.ne.s32.totalorder %s117, %s118
      %p127 = scmp.eq.s32.totalorder %s23, 0
      %p128 = por %p126, %p127
      %p129 = scmp.ne.s32.totalorder %s117, %s118
      %p130 = scmp.eq.s32.totalorder %s24, 1
      %p131 = por %p129, %p130
      %p133 = scmp.ne.s32.totalorder %s118, %s132
      %p134 = scmp.eq.s32.totalorder %s24, 0
      %p135 = por %p133, %p134
      %s136 = ssub.s32 %s18, %s25
      %p137 = scmp.eq.s32.totalorder %s136, 0
      %s139 = sadd.s32 %s138, 1
      %s140 = scalar_select %p137, %s138, %s139
      %p143 = pneg %p137
      %p144 = scmp.eq.s32.totalorder %s18, 1
      %p145 = por %p143, %p144
      %p146 = scmp.ne.s32.totalorder %s138, %s141
      %p147 = scmp.eq.s32.totalorder %s18, 0
      %p148 = por %p146, %p147
      %p149 = scmp.ne.s32.totalorder %s138, %s141
      %p150 = scmp.eq.s32.totalorder %s23, 1
      %p151 = por %p149, %p150
      %p152 = scmp.ne.s32.totalorder %s141, %s142
      %p153 = scmp.eq.s32.totalorder %s23, 0
      %p154 = por %p152, %p153
      %p155 = scmp.ne.s32.totalorder %s141, %s142
      %p156 = scmp.eq.s32.totalorder %s24, 1
      %p157 = por %p155, %p156
      %p159 = scmp.ne.s32.totalorder %s142, %s158
      %p160 = scmp.eq.s32.totalorder %s24, 0
      %p161 = por %p159, %p160
      %p162 = scmp.le.s32.totalorder 1, %s18
      %p163 = scmp.lt.s32.totalorder %s18, 3
      %p164 = pnand %p162, %p163
      %p165 = pneg %p164
      // Predicated region
      $region9: #{tpu_custom_call.1} parent=5 // pred_check
        _
      $region10: #{tpu_custom_call.1} parent=5 // pred_check_branch
        %167 = sbr.rel (%p164) target = $region12
      $region11: #{tpu_custom_call.1} parent=5 // pred_region
        %s168 = ssub.s32 %s18, 1
        // Predicated region
        $region13: #{tpu_custom_call.1} parent=11 // pred_check
          %p169 = pneg %p65
        $region14: #{tpu_custom_call.1} parent=11 // pred_check_branch
          %171 = sbr.rel (%p169) target = $region16
        $region15: #{tpu_custom_call.1} parent=11 // pred_region
          %173 = vsyncadd [#allocation6], 0
          %s174 = sshll.u32 %s1, 4
          %s175 = int_to_ptr.hbm [resolvable:$true] %s174
          %s176 = sshll.u32 [#allocation5], 4
          %s177 = int_to_ptr.vmem [resolvable:$true] %s176
          %182 = dma.hbm_to_vmem [thread:$0]  %s175, 512, %s177, [#allocation6], 128, 128, 8
        $region16: #{tpu_custom_call.1} parent=11 // pred_fallthru
          _
        // Predicated region
        $region17: #{tpu_custom_call.1} parent=11 // pred_check
          %p183 = pneg %p86
        $region18: #{tpu_custom_call.1} parent=11 // pred_check_branch
          %185 = sbr.rel (%p183) target = $region20
        $region19: #{tpu_custom_call.1} parent=11 // pred_region
          _
        $region20: #{tpu_custom_call.1} parent=11 // pred_fallthru
          _
        // Predicated region
        $region21: #{tpu_custom_call.1} parent=11 // pred_check
          %p186 = pneg %p107
        $region22: #{tpu_custom_call.1} parent=11 // pred_check_branch
          %188 = sbr.rel (%p186) target = $region24
        $region23: #{tpu_custom_call.1} parent=11 // pred_region
          _
        $region24: #{tpu_custom_call.1} parent=11 // pred_fallthru
          _
        // Predicated region
        $region25: #{tpu_custom_call.1} parent=11 // pred_check
          %p189 = pneg %p128
        $region26: #{tpu_custom_call.1} parent=11 // pred_check_branch
          %191 = sbr.rel (%p189) target = $region28
        $region27: #{tpu_custom_call.1} parent=11 // pred_region
          _
        $region28: #{tpu_custom_call.1} parent=11 // pred_fallthru
          _
      $region12: #{tpu_custom_call.1} parent=5 // pred_fallthru
        _
      %p192 = scmp.lt.s32.totalorder %s18, 2
      // Predicated region
      $region29: #{tpu_custom_call.1} parent=5 // pred_check
        %p193 = pneg %p192
      $region30: #{tpu_custom_call.1} parent=5 // pred_check_branch
        %195 = sbr.rel (%p193) target = $region32
      $region31: #{tpu_custom_call.1} parent=5 // pred_region
        // Predicated region
        $region33: #{tpu_custom_call.1} parent=31 // pred_check
          %p196 = pneg %p38
        $region34: #{tpu_custom_call.1} parent=31 // pred_check_branch
          %198 = sbr.rel (%p196) target = $region36
        $region35: #{tpu_custom_call.1} parent=31 // pred_region
          %s199 = sand.u32 %s28, 1
          %s200 = scalar_lea.sflag [#allocation3], %s199
          %s201 = sand.u32 %s28, 1
          %s202 = smul.addr %s201, 8
          %s203 = scalar_lea.vmem [#allocation2], %s202
          %205 = vsyncadd %s200, 0
          %s206 = smul.addr %s18, 8
          %s207 = scalar_lea.hbm %s0, %s206
          %s209 = sshll.u32 %s207, 4
          %s210 = int_to_ptr.hbm [resolvable:$true] %s209
          %s211 = sshll.u32 %s203, 4
          %s212 = int_to_ptr.vmem [resolvable:$true] %s211
          %214 = dma.hbm_to_vmem [thread:$0]  %s210, 128, %s212, %s200
        $region36: #{tpu_custom_call.1} parent=31 // pred_fallthru
          _
      $region32: #{tpu_custom_call.1} parent=5 // pred_fallthru
        _
      %p215 = scmp.le.s32.totalorder 1, %s18
      %p216 = scmp.lt.s32.totalorder %s18, 3
      %p217 = pnand %p215, %p216
      %p218 = pneg %p217
      // Predicated region
      $region37: #{tpu_custom_call.1} parent=5 // pred_check
        _
      $region38: #{tpu_custom_call.1} parent=5 // pred_check_branch
        %220 = sbr.rel (%p217) target = $region40
      $region39: #{tpu_custom_call.1} parent=5 // pred_region
        %s221 = ssub.s32 %s18, 1
        %s222 = sand.u32 %s31, 1
        %s223 = scalar_lea.sflag [#allocation3], %s222
        %s224 = sand.u32 %s31, 1
        %s225 = smul.addr %s224, 8
        %s226 = scalar_lea.vmem [#allocation2], %s225
        // Predicated region
        $region41: #{tpu_custom_call.1} parent=39 // pred_check
          %p227 = pneg %p44
        $region42: #{tpu_custom_call.1} parent=39 // pred_check_branch
          %229 = sbr.rel (%p227) target = $region44
        $region43: #{tpu_custom_call.1} parent=39 // pred_region
          %231 = dma.done %s223, 128
        $region44: #{tpu_custom_call.1} parent=39 // pred_fallthru
          _
        // Predicated region
        $region45: #{tpu_custom_call.1} parent=39 // pred_check
          %p232 = pneg %p65
        $region46: #{tpu_custom_call.1} parent=39 // pred_check_branch
          %234 = sbr.rel (%p232) target = $region48
        $region47: #{tpu_custom_call.1} parent=39 // pred_region
          %236 = dma.done [#allocation6], 512
        $region48: #{tpu_custom_call.1} parent=39 // pred_fallthru
          _
        %s237 = sand.u32 %s31, 1
        %s238 = scalar_lea.sflag [#allocation3], %s237
        %s239 = sand.u32 %s31, 1
        %s240 = smul.addr %s239, 8
        %s241 = scalar_lea.vmem [#allocation2], %s240
        %p242 = pneg %p44
        %p243 = pneg %p41
        %p244 = pneg %p65
        %p245 = pneg %p62
        %p246 = pneg %p86
        %p247 = pneg %p83
        %p248 = pneg %p107
        %p249 = pneg %p104
        %p250 = pneg %p128
        %p251 = pneg %p125
        %p252 = pneg %p154
        %p253 = pneg %p151
        %s254 = sand.u32 %s141, 1
        %s255 = scalar_lea.sflag [#allocation4], %s254
        %s256 = sand.u32 %s141, 1
        %s257 = smul.addr %s256, 8
        %s258 = scalar_lea.vmem [#allocation7], %s257
        %v259 = vld [vmem:[%s226] sm:$0xff]
        %v260 = vld [vmem:[#allocation5] sm:$0xff]
        %v261 = vld [vmem:[#allocation5 + $0x8] sm:$0xff]
        %v262 = vld [vmem:[#allocation5 + $0x10] sm:$0xff]
        %v263 = vld [vmem:[#allocation5 + $0x18] sm:$0xff]
        %v264 = vld [vmem:[%s2] sm:$0x1]
        %v266 = vperm.slane %v264, 0
        %vm268 = vcmask 261120
        %v270 = vsel %vm268, %v259, 0
        %v273 = vsel %vm268, %v260, 0
        %v276 = vsel %vm268, %v261, 0
        %v279 = vsel %vm268, %v262, 0
        %v282 = vsel %vm268, %v263, 0
        %284 = vmatpush.xpose.msra.mxu0 0.0
        %285 = vmatpush.xpose.msra.mxu0 0.0
        %286 = vmatpush.xpose.msra.mxu0 0.0
        %287 = vmatpush.xpose.msra.mxu0 0.0
        %288 = vmatpush.xpose.msra.mxu0 0.0
        %289 = vmatpush.xpose.msra.mxu0 0.0
        %290 = vmatpush.xpose.msra.mxu0 0.0
        %291 = vmatpush.xpose.msra.mxu0 0.0
        %292 = vmatpush.xpose.msra.mxu0 0.0
        %293 = vmatpush.xpose.msra.mxu0 0.0
        %294 = vmatpush.xpose.msra.mxu0 0.0
        %295 = vmatpush.xpose.msra.mxu0 0.0
        %296 = vmatpush.xpose.msra.mxu0 %v282
        %297 = vmatpush.xpose.msra.mxu0 %v279
        %298 = vmatpush.xpose.msra.mxu0 %v276
        %299 = vmatpush.xpose.msra.mxu0 %v273
        %300 = vmatmul.f32.gmra.mxu0 %v270
        %v301 = vpop.f32.mrf.mxu0
        %v302 = vadd.f32 %v266, %v301
        %303 = vdwg.mxu0
        %v304 = vmul.f32 %v302, 0.5
        %v305 = vmul.f32 %v302, 0.70710677
        %v306 = vmul.f32 %v305, %v305
        %v307 = vmin.f32 16.0, %v306
        %v308 = vmul.f32 %v307, 2.1237322e-06
        %v309 = vadd.f32 %v308, 0.00028619796
        %v310 = vmul.f32 %v307, %v309
        %v311 = vadd.f32 %v310, 0.0036580483
        %v312 = vmul.f32 %v307, %v311
        %v313 = vadd.f32 %v312, 0.05243302
        %v314 = vmul.f32 %v307, %v313
        %v315 = vadd.f32 %v314, 0.18741608
        %v316 = vmul.f32 %v307, %v315
        %v317 = vadd.f32 %v316, 1.1283791
        %v318 = vmul.f32 %v305, %v317
        %v319 = vmul.f32 %v307, 3.8918573e-05
        %v320 = vadd.f32 %v319, 0.001143296
        %v321 = vmul.f32 %v307, %v320
        %v322 = vadd.f32 %v321, 0.014752088
        %v323 = vmul.f32 %v307, %v322
        %v324 = vadd.f32 %v323, 0.112945676
        %v325 = vmul.f32 %v307, %v324
        %v326 = vadd.f32 %v325, 0.4994258
        %v327 = vmul.f32 %v307, %v326
        %v328 = vadd.f32 %v327, 1.0
        %v329 = vrcp.pop %v328
        %v330 = vmul.f32 %v328, %v329
        %v331 = vsub.f32 1.0, %v330
        %v332 = vmul.f32 %v329, %v331
        %v333 = vadd.f32 %v329, %v332
        %vm334 = vweird.f32 %v328
        %vm335 = vweird.f32 %v329
        %vm336 = vmor %vm334, %vm335
        %v337 = vsel %vm336, %v329, %v333
        %v338 = vand.u32 2147483647, %v328
        %vm339 = vcmp.eq.f32.partialorder %v338, 8.507059e+37
        %v340 = vand.u32 %v328, 2147483648
        %v341 = vor.u32 1.1754944e-38, %v340
        %v342 = vsel %vm339, %v341, %v337
        %v343 = vmul.f32 %v318, %v342
        %v344 = vmin.f32 %v343, 1.0
        %v345 = vmax.f32 %v344, -1.0
        %v346 = vadd.f32 %v345, 1.0
        %v347 = vmul.f32 %v304, %v346
        %v348 = vld [vmem:[%s3] sm:$0x1]
        %v349 = vld [vmem:[%s4] sm:$0x1]
        %v350 = vsel %vm268, %v347, 0.0
        %351 = vadd.xlane.f32.xlu0 %v350
        %v352 = vpop.xlane.xlu0 %351
        %v353 = vrcp.pop 32.0
        %v354 = vmul.f32 32.0, %v353
        %v355 = vsub.f32 1.0, %v354
        %v356 = vmul.f32 %v353, %v355
        %v357 = vadd.f32 %v353, %v356
        %vm358 = vweird.f32 %v353
        %v359 = vsel %vm358, %v353, %v357
        %v360 = vmul.f32 %v352, %v359
        %v361 = vsub.f32 %v347, %v360
        %v362 = vmul.f32 %v361, %v361
        %v363 = vsel %vm268, %v362, 0.0
        %364 = vadd.xlane.f32.xlu0 %v363
        %v365 = vpop.xlane.xlu0 %364
        %v366 = vmul.f32 %v365, %v359
        %v367 = vadd.f32 %v366, 1e-12
        %v368 = vrsqrt.pop %v367
        %v369 = vmul.f32 %v368, %v367
        %v370 = vmul.f32 %v369, %v368
        %v371 = vmul.f32 0.5, %v370
        %v372 = vsub.f32 1.5, %v371
        %v373 = vmul.f32 %v368, %v372
        %vm374 = vweird.f32 %v367
        %vm375 = vweird.f32 %v368
        %vm376 = vmor %vm374, %vm375
        %v377 = vsel %vm376, %v368, %v373
        %v378 = vmul.f32 %v361, %v377
        %v380 = vperm.slane %v348, 0
        %v382 = vmul.f32 %v378, %v380
        %v384 = vperm.slane %v349, 0
        %v386 = vadd.f32 %v382, %v384
        %387 = vst.msk [vmem:[%s258] sm:$0xff] %vm268, %v386
        %s388 = sand.u32 %s141, 1
        %s389 = scalar_lea.sflag [#allocation4], %s388
        %s390 = sand.u32 %s141, 1
        %s391 = smul.addr %s390, 8
        %s392 = scalar_lea.vmem [#allocation7], %s391
        // Predicated region
        $region49: #{tpu_custom_call.1} parent=39 // pred_check
          %p393 = pneg %p151
        $region50: #{tpu_custom_call.1} parent=39 // pred_check_branch
          %395 = sbr.rel (%p393) target = $region52
        $region51: #{tpu_custom_call.1} parent=39 // pred_region
          %397 = vsyncadd %s389, 0
          %s398 = smul.addr %s23, 8
          %s399 = scalar_lea.hbm %s5, %s398
          %s401 = sshll.u32 %s392, 4
          %s402 = int_to_ptr.vmem [resolvable:$true] %s401
          %s403 = sshll.u32 %s399, 4
          %s404 = int_to_ptr.hbm [resolvable:$true] %s403
          %406 = dma.vmem_to_hbm [thread:$0]  %s402, 128, %s404, %s389
        $region52: #{tpu_custom_call.1} parent=39 // pred_fallthru
          _
      $region40: #{tpu_custom_call.1} parent=5 // pred_fallthru
        _
      %p407 = scmp.le.s32.totalorder 2, %s18
      // Predicated region
      $region53: #{tpu_custom_call.1} parent=5 // pred_check
        %p408 = pneg %p407
      $region54: #{tpu_custom_call.1} parent=5 // pred_check_branch
        %410 = sbr.rel (%p408) target = $region56
      $region55: #{tpu_custom_call.1} parent=5 // pred_region
        %s411 = ssub.s32 %s18, 2
        // Predicated region
        $region57: #{tpu_custom_call.1} parent=55 // pred_check
          %p412 = pneg %p157
        $region58: #{tpu_custom_call.1} parent=55 // pred_check_branch
          %414 = sbr.rel (%p412) target = $region60
        $region59: #{tpu_custom_call.1} parent=55 // pred_region
          %s415 = sand.u32 %s142, 1
          %s416 = scalar_lea.sflag [#allocation4], %s415
          %s417 = sand.u32 %s142, 1
          %s418 = smul.addr %s417, 8
          %s419 = scalar_lea.vmem [#allocation7], %s418
          %421 = dma.done %s416, 128
        $region60: #{tpu_custom_call.1} parent=55 // pred_fallthru
          _
      $region56: #{tpu_custom_call.1} parent=5 // pred_fallthru
        _
    $region6: #{tpu_custom_call.1} parent=1 // loop_footer
      %s22 = sadd.s32 1, %s18
    $region7: #{tpu_custom_call.1} parent=1 // loop_footer_branch
      %17 = sbr.rel target = $region3
    $region8: #{tpu_custom_call.1} parent=1 // loop_exit
      _
    %422 = vsyncpa [#allocation3], 1
    %s423 = scalar_lea.sflag [#allocation3], 1
    %424 = vsyncpa %s423, 1
    %425 = vsyncpa [#allocation6], 1
    %426 = vsyncpa [#allocation4], 1
    %s427 = scalar_lea.sflag [#allocation4], 1
    %428 = vsyncpa %s427, 1

</llo_original>
